<compile_context>
chip_gen: v7x
topology: tpu7x:2x2x1
jax: 0.10.0
libtpu: 0.0.40
codegen_flags: <defaults>
</compile_context>

<pallas_src>
import jax
import jax.numpy as jnp
from jax import lax
from jax.experimental import pallas as pl
from jax.experimental.pallas import tpu as pltpu

PLANNING_HORIZON = 5
_LANE = 128
_SUBLANE = 8


def _round_up(x, m):
    return ((x + m - 1) // m) * m


def _i32c(v):
    """Reinterpret a uint32 constant as a Python int that fits in int32."""
    v &= 0xFFFFFFFF
    return v - (1 << 32) if v >= (1 << 31) else v


_MIX_M1 = _i32c(0x7FEB352D)
_MIX_M2 = _i32c(0x846CA68B)
_SALT = _i32c(0x9E3779B9)


def _mix32(x):
    """lowbias32 avalanche hash on int32 (single pass -- already full avalanche)."""
    x = x ^ lax.shift_right_logical(x, 16)
    x = x * _MIX_M1
    x = x ^ lax.shift_right_logical(x, 15)
    x = x * _MIX_M2
    x = x ^ lax.shift_right_logical(x, 16)
    return x


def _uniform01_from_bits(bits):
    """int32 random bits -> f32 in [0, 1) (exact multiples of 2^-24)."""
    return lax.shift_right_logical(bits, 8).astype(jnp.float32) * (2.0 ** -24)


def _std_normal_from_bits(bits):
    """int32 random bits -> ~N(0,1) via sqrt(2)*erfinv(x).

    Central-branch-only Giles f32 polynomial (tail branch removed per perf
    review; w is clamped at 5 so the ~0.4% of draws with |z| > ~2.9 are
    truncated to ~3.1 -- acceptable distortion for a dummy agent).  Uses one
    EUP log plus VALU FMAs; |x| <= 1 - 2^-24 so the log is always finite.
    """
    v = lax.shift_right_logical(bits, 8) - (1 << 23)          # int32 in [-2^23, 2^23)
    x = (v.astype(jnp.float32) + 0.5) * (2.0 ** -23)          # exact, |x| <= 1 - 2^-24
    w = -jnp.log((1.0 - x) * (1.0 + x))                       # w in (0, ~16]
    w = jnp.minimum(w, 5.0)                                    # keep central branch valid

    wc = w - 2.5
    p = jnp.float32(2.81022636e-08)
    for c in (3.43273939e-07, -3.5233877e-06, -4.39150654e-06, 2.1858087e-04,
              -1.25372503e-03, -4.17768164e-03, 2.46640727e-01, 1.50140941e+00):
        p = p * wc + c
    return (1.4142135623730951 * p) * x                       # sqrt(2) * erfinv(x)


def _make_rng_slab_kernel(n_norm, cn, tb):
    """Kernel filling one (tb, cn) slab of standard normals; the single U[0,1)
    value per row is folded into padding column `n_norm` of the last group."""
    n_groups = cn // _LANE
    u_group = n_norm // _LANE            # always the last lane group (cn >= n_norm+1)
    u_col_local = n_norm % _LANE

    def kernel(seed_ref, out_ref):
        step = pl.program_id(0)
        key = seed_ref[0] ^ _SALT

        # Hoisted per-element counter base (shared across lane groups).
        row = lax.broadcasted_iota(jnp.int32, (tb, _LANE), 0)
        col = lax.broadcasted_iota(jnp.int32, (tb, _LANE), 1)
        base = (row + step * tb) * cn + col

        for g in range(n_groups):        # static unroll; 1-2 groups in practice
            bits = _mix32((base + g * _LANE) ^ key)
            vals = _std_normal_from_bits(bits)
            if g == u_group:
                # Fold the single uniform column (confidence / uncertainty)
                # into the padding of this lane group: no separate RNG pass.
                vals = jnp.where(col == u_col_local,
                                 _uniform01_from_bits(bits), vals)
            out_ref[:, g * _LANE:(g + 1) * _LANE] = vals

    return kernel


def _choose_batch_tile(batch):
    """(tile_rows, padded_batch): tile multiple of 8, >=2 (even) blocks when
    batch > 8 so both v7x TensorCores get work, tile capped at 1024 rows to
    amortize per-step overhead, padding kept minimal (no fixed-256 waste)."""
    bp = _round_up(max(batch, 1), _SUBLANE)
    if bp <= _SUBLANE:
        return bp, bp
    max_tb = 1024
    n_blocks = max(2, -(-bp // max_tb))
    if n_blocks % 2:
        n_blocks += 1
    tb = _round_up(-(-bp // n_blocks), _SUBLANE)
    bp = _round_up(bp, tb)
    return tb, bp


def dummy_transfer_agent_forward(state, *, seed, num_actions,
                                 output_feature_dim=64, agent_type="student"):
    """JAX/Pallas equivalent of DummyTransferAgent.forward."""
    if num_actions <= 0:
        raise ValueError("DummyTransferAgent num_actions must be > 0")
    batch = state.shape[0]
    a, f = num_actions, output_feature_dim

    if agent_type == "mentor":
        n_norm = a + 1 + 2 * f + PLANNING_HORIZON * a
    else:
        n_norm = a + 1 + f
    # +1 guarantees at least one padding column to hold the folded uniform.
    cn = _round_up(n_norm + 1, _LANE)

    tb, bp = _choose_batch_tile(batch)
    grid = (bp // tb,)

    kernel = _make_rng_slab_kernel(n_norm, cn, tb)
    seed_arr = jnp.asarray([seed], dtype=jnp.int32)

    slab = pl.pallas_call(
        kernel,
        out_shape=jax.ShapeDtypeStruct((bp, cn), jnp.float32),
        grid_spec=pltpu.PrefetchScalarGridSpec(
            num_scalar_prefetch=1,
            grid=grid,
            in_specs=[],
            out_specs=pl.BlockSpec((tb, cn), lambda i, seed_ref: (i, 0)),
        ),
        compiler_params=pltpu.CompilerParams(
            dimension_semantics=("parallel",),   # batch tiles shard over v7x's 2 TCs
        ),
    )(seed_arr)

    # Layout plumbing: slice the lane-dense slab into the logical outputs.
    # (Consumers should read these views under the same jit to avoid an extra
    # HBM pass at large batch.)
    slab = slab[:batch]
    uniform_col = slab[:, n_norm:n_norm + 1]     # the folded U[0,1) column

    if agent_type == "mentor":
        off = 0
        policy_logits = slab[:, off:off + a]
        off += a
        value = slab[:, off:off + 1]
        off += 1
        features = slab[:, off:off + f]
        off += f
        causal_features = slab[:, off:off + f]
        off += f
        planning_logits = slab[:, off:off + PLANNING_HORIZON * a].reshape(
            batch, PLANNING_HORIZON, a)
        return {
            "policy_logits": policy_logits,
            "value": value,
            "features": features,
            "causal_features": causal_features,
            "planning_logits": planning_logits,
            "confidence": uniform_col,
        }
    else:
        primary_logits = slab[:, 0:a]
        value = slab[:, a:a + 1]
        features = slab[:, a + 1:a + 1 + f]
        return {
            "primary_logits": primary_logits,
            "policy_logits": primary_logits,   # same tensor, matches PyTorch aliasing
            "value": value,
            "features": features,
            "uncertainty": {"total": uniform_col},
        }


if __name__ == "__main__":
    B, STATE_DIM, NUM_ACTIONS, FEAT_DIM = 2, 32, 8, 64

    key = jax.random.PRNGKey(0)
    k_state, k_w, k_b = jax.random.split(key, 3)
    state = jax.random.normal(k_state, (B, STATE_DIM), dtype=jnp.float32)

    # fc_dummy exists in the PyTorch __init__ but is never applied in forward();
    # kept here only to mirror the module contract.
    # TODO(synk): fc_dummy Linear is dead weight in the spec's forward -- not executed.
    fc_dummy_w = jax.random.normal(k_w, (NUM_ACTIONS, STATE_DIM),
                                   dtype=jnp.float32) * (1.0 / STATE_DIM ** 0.5)
    fc_dummy_b = jnp.zeros((NUM_ACTIONS,), dtype=jnp.float32)

    out_s = dummy_transfer_agent_forward(
        state, seed=0, num_actions=NUM_ACTIONS,
        output_feature_dim=FEAT_DIM, agent_type="student")
    out_m = dummy_transfer_agent_forward(
        state, seed=1, num_actions=NUM_ACTIONS,
        output_feature_dim=FEAT_DIM, agent_type="mentor")

    jax.block_until_ready((out_s, out_m))

    # Shape / semantics checks (small batch).
    assert out_s["primary_logits"].shape == (B, NUM_ACTIONS)
    assert out_s["policy_logits"] is out_s["primary_logits"]
    assert out_s["value"].shape == (B, 1)
    assert out_s["features"].shape == (B, FEAT_DIM)
    assert out_s["uncertainty"]["total"].shape == (B, 1)
    assert bool(jnp.all(out_s["uncertainty"]["total"] >= 0.0))
    assert bool(jnp.all(out_s["uncertainty"]["total"] < 1.0))

    assert out_m["policy_logits"].shape == (B, NUM_ACTIONS)
    assert out_m["value"].shape == (B, 1)
    assert out_m["features"].shape == (B, FEAT_DIM)
    assert out_m["causal_features"].shape == (B, FEAT_DIM)
    assert out_m["planning_logits"].shape == (B, PLANNING_HORIZON, NUM_ACTIONS)
    assert out_m["confidence"].shape == (B, 1)
    assert bool(jnp.all(out_m["confidence"] >= 0.0))
    assert bool(jnp.all(out_m["confidence"] < 1.0))

    assert bool(jnp.all(jnp.isfinite(out_m["policy_logits"])))
    assert bool(jnp.all(jnp.isfinite(out_m["planning_logits"])))

    # Larger batch exercises the multi-block "parallel" grid path and gives a
    # meaningful distribution check (300 rows x 354 normals ~ 106k samples).
    BL = 300
    state_l = jax.random.normal(jax.random.PRNGKey(1), (BL, STATE_DIM),
                                dtype=jnp.float32)
    out_l = dummy_transfer_agent_forward(
        state_l, seed=7, num_actions=NUM_ACTIONS,
        output_feature_dim=FEAT_DIM, agent_type="mentor")
    jax.block_until_ready(out_l)

    assert out_l["planning_logits"].shape == (BL, PLANNING_HORIZON, NUM_ACTIONS)
    assert out_l["confidence"].shape == (BL, 1)
    assert bool(jnp.all(out_l["confidence"] >= 0.0))
    assert bool(jnp.all(out_l["confidence"] < 1.0))

    l_norm = jnp.concatenate([
        out_l["policy_logits"].ravel(), out_l["value"].ravel(),
        out_l["features"].ravel(), out_l["causal_features"].ravel(),
        out_l["planning_logits"].ravel()])
    assert bool(jnp.all(jnp.isfinite(l_norm)))
    assert abs(float(jnp.mean(l_norm))) < 0.1
    assert 0.8 < float(jnp.std(l_norm)) < 1.2          # tail truncated at ~3.1, negligible
    u = out_l["confidence"].ravel()
    assert abs(float(jnp.mean(u)) - 0.5) < 0.15        # uniforms look uniform-ish

    print("KERNEL_OK")
</pallas_src>

<mosaic_0001>
module attributes {stable_mosaic.version = 11 : i64} {
  func.func @kernel(%arg0: i32, %arg1: memref<1xi32, #tpu.memory_space<smem>>, %arg2: memref<8x128xf32, #tpu.memory_space<vmem>>) attributes {dimension_semantics = [#tpu.dimension_semantics<parallel>], iteration_bounds = array<i64: 1>, scalar_prefetch = 1 : i64, scratch_operands = 0 : i64, tpu.core_type = #tpu.core_type<tc>, window_params = [{transform_indices = @transform_0, window_bounds = array<i64: 8, 128>}]} {
    %c0 = arith.constant 0 : index
    %0 = memref.load %arg1[%c0] : memref<1xi32, #tpu.memory_space<smem>>
    %c-1640531527_i32 = arith.constant -1640531527 : i32
    %1 = arith.xori %0, %c-1640531527_i32 : i32
    %2 = tpu.iota {dimensions = array<i32: 0>} : vector<8x128xi32>
    %3 = tpu.iota {dimensions = array<i32: 1>} : vector<8x128xi32>
    %c8_i32 = arith.constant 8 : i32
    %4 = arith.muli %arg0, %c8_i32 : i32
    %5 = vector.broadcast %4 : i32 to vector<8x128xi32>
    %6 = arith.addi %2, %5 : vector<8x128xi32>
    %c128_i32 = arith.constant 128 : i32
    %7 = vector.broadcast %c128_i32 : i32 to vector<8x128xi32>
    %8 = arith.muli %6, %7 : vector<8x128xi32>
    %9 = arith.addi %8, %3 : vector<8x128xi32>
    %c0_i32 = arith.constant 0 : i32
    %10 = vector.broadcast %c0_i32 : i32 to vector<8x128xi32>
    %11 = arith.addi %9, %10 : vector<8x128xi32>
    %12 = vector.broadcast %1 : i32 to vector<8x128xi32>
    %13 = arith.xori %11, %12 : vector<8x128xi32>
    %c16_i32 = arith.constant 16 : i32
    %14 = vector.broadcast %c16_i32 : i32 to vector<8x128xi32>
    %15 = arith.shrui %13, %14 : vector<8x128xi32>
    %16 = arith.xori %13, %15 : vector<8x128xi32>
    %c2146121005_i32 = arith.constant 2146121005 : i32
    %17 = vector.broadcast %c2146121005_i32 : i32 to vector<8x128xi32>
    %18 = arith.muli %16, %17 : vector<8x128xi32>
    %c15_i32 = arith.constant 15 : i32
    %19 = vector.broadcast %c15_i32 : i32 to vector<8x128xi32>
    %20 = arith.shrui %18, %19 : vector<8x128xi32>
    %21 = arith.xori %18, %20 : vector<8x128xi32>
    %c-2073254261_i32 = arith.constant -2073254261 : i32
    %22 = vector.broadcast %c-2073254261_i32 : i32 to vector<8x128xi32>
    %23 = arith.muli %21, %22 : vector<8x128xi32>
    %c16_i32_0 = arith.constant 16 : i32
    %24 = vector.broadcast %c16_i32_0 : i32 to vector<8x128xi32>
    %25 = arith.shrui %23, %24 : vector<8x128xi32>
    %26 = arith.xori %23, %25 : vector<8x128xi32>
    %c8_i32_1 = arith.constant 8 : i32
    %27 = vector.broadcast %c8_i32_1 : i32 to vector<8x128xi32>
    %28 = arith.shrui %26, %27 : vector<8x128xi32>
    %c8388608_i32 = arith.constant 8388608 : i32
    %29 = vector.broadcast %c8388608_i32 : i32 to vector<8x128xi32>
    %30 = arith.subi %28, %29 : vector<8x128xi32>
    %31 = arith.sitofp %30 : vector<8x128xi32> to vector<8x128xf32>
    %cst = arith.constant 5.000000e-01 : f32
    %32 = vector.broadcast %cst : f32 to vector<8x128xf32>
    %33 = arith.addf %31, %32 : vector<8x128xf32>
    %cst_2 = arith.constant 1.1920929E-7 : f32
    %34 = vector.broadcast %cst_2 : f32 to vector<8x128xf32>
    %35 = arith.mulf %33, %34 : vector<8x128xf32>
    %cst_3 = arith.constant 1.000000e+00 : f32
    %36 = vector.broadcast %cst_3 : f32 to vector<8x128xf32>
    %37 = arith.subf %36, %35 : vector<8x128xf32>
    %cst_4 = arith.constant 1.000000e+00 : f32
    %38 = vector.broadcast %cst_4 : f32 to vector<8x128xf32>
    %39 = arith.addf %38, %35 : vector<8x128xf32>
    %40 = arith.mulf %37, %39 : vector<8x128xf32>
    %41 = math.log %40 : vector<8x128xf32>
    %cst_5 = arith.constant 0.000000e+00 : f32
    %42 = vector.broadcast %cst_5 : f32 to vector<8x128xf32>
    %43 = arith.subf %42, %41 : vector<8x128xf32>
    %cst_6 = arith.constant 5.000000e+00 : f32
    %44 = vector.broadcast %cst_6 : f32 to vector<8x128xf32>
    %45 = arith.minimumf %43, %44 : vector<8x128xf32>
    %cst_7 = arith.constant 2.500000e+00 : f32
    %46 = vector.broadcast %cst_7 : f32 to vector<8x128xf32>
    %47 = arith.subf %45, %46 : vector<8x128xf32>
    %cst_8 = arith.constant 2.81022636E-8 : f32
    %48 = vector.broadcast %cst_8 : f32 to vector<8x128xf32>
    %49 = arith.mulf %48, %47 : vector<8x128xf32>
    %cst_9 = arith.constant 3.43273939E-7 : f32
    %50 = vector.broadcast %cst_9 : f32 to vector<8x128xf32>
    %51 = arith.addf %49, %50 : vector<8x128xf32>
    %52 = arith.mulf %51, %47 : vector<8x128xf32>
    %cst_10 = arith.constant -3.5233877E-6 : f32
    %53 = vector.broadcast %cst_10 : f32 to vector<8x128xf32>
    %54 = arith.addf %52, %53 : vector<8x128xf32>
    %55 = arith.mulf %54, %47 : vector<8x128xf32>
    %cst_11 = arith.constant -4.39150654E-6 : f32
    %56 = vector.broadcast %cst_11 : f32 to vector<8x128xf32>
    %57 = arith.addf %55, %56 : vector<8x128xf32>
    %58 = arith.mulf %57, %47 : vector<8x128xf32>
    %cst_12 = arith.constant 2.1858087E-4 : f32
    %59 = vector.broadcast %cst_12 : f32 to vector<8x128xf32>
    %60 = arith.addf %58, %59 : vector<8x128xf32>
    %61 = arith.mulf %60, %47 : vector<8x128xf32>
    %cst_13 = arith.constant -0.00125372503 : f32
    %62 = vector.broadcast %cst_13 : f32 to vector<8x128xf32>
    %63 = arith.addf %61, %62 : vector<8x128xf32>
    %64 = arith.mulf %63, %47 : vector<8x128xf32>
    %cst_14 = arith.constant -0.00417768164 : f32
    %65 = vector.broadcast %cst_14 : f32 to vector<8x128xf32>
    %66 = arith.addf %64, %65 : vector<8x128xf32>
    %67 = arith.mulf %66, %47 : vector<8x128xf32>
    %cst_15 = arith.constant 0.246640727 : f32
    %68 = vector.broadcast %cst_15 : f32 to vector<8x128xf32>
    %69 = arith.addf %67, %68 : vector<8x128xf32>
    %70 = arith.mulf %69, %47 : vector<8x128xf32>
    %cst_16 = arith.constant 1.50140941 : f32
    %71 = vector.broadcast %cst_16 : f32 to vector<8x128xf32>
    %72 = arith.addf %70, %71 : vector<8x128xf32>
    %cst_17 = arith.constant 1.41421354 : f32
    %73 = vector.broadcast %cst_17 : f32 to vector<8x128xf32>
    %74 = arith.mulf %73, %72 : vector<8x128xf32>
    %75 = arith.mulf %74, %35 : vector<8x128xf32>
    %c73_i32 = arith.constant 73 : i32
    %76 = vector.broadcast %c73_i32 : i32 to vector<8x128xi32>
    %77 = arith.cmpi eq, %3, %76 : vector<8x128xi32>
    %c8_i32_18 = arith.constant 8 : i32
    %78 = vector.broadcast %c8_i32_18 : i32 to vector<8x128xi32>
    %79 = arith.shrui %26, %78 : vector<8x128xi32>
    %80 = arith.sitofp %79 : vector<8x128xi32> to vector<8x128xf32>
    %cst_19 = arith.constant 5.96046448E-8 : f32
    %81 = vector.broadcast %cst_19 : f32 to vector<8x128xf32>
    %82 = arith.mulf %80, %81 : vector<8x128xf32>
    %83 = arith.select %77, %82, %75 : vector<8x128xi1>, vector<8x128xf32>
    %c0_20 = arith.constant 0 : index
    %c0_21 = arith.constant 0 : index
    %84 = vector.load %arg2[%c0_20, %c0_21] : memref<8x128xf32, #tpu.memory_space<vmem>>, vector<8x128xf32>
    tpu.vector_store %arg2[%c0_20, %c0_21], %83 {strides = array<i32>} : memref<8x128xf32, #tpu.memory_space<vmem>>, vector<8x128xf32>,
    return
  }
  func.func @transform_0(%arg0: i32, %arg1: memref<1xi32, #tpu.memory_space<smem>>) -> (i32, i32) {
    %c0_i32 = arith.constant 0 : i32
    %c0_i32_0 = arith.constant 0 : i32
    return %arg0, %c0_i32 : i32, i32
  }
}

</mosaic_0001>

<llo_original>
// kernel: tpu_custom_call.1
$region0: #{tpu_custom_call.1}
  #allocation0 [shape = 'u32[]', space=smem, size = 0x4, offset = 0x4, fixed_abs, tag = 'smem constant byte address 0x4 - core index']
  #allocation1 [shape = 'u32[144,128]{1,0:T(1,128)}', space=vmem, size = 0x12000, scoped, tag = 'internal scratch']
  #allocation2 [shape = 's32[1]{0}', space=sflag, size = 0x4, scoped, tag = 'scoped memory for tpu_custom_call.1']
  #allocation3 [shape = 's32[1]{0:T(128)S(6)}', space=smem, size = 0x200, scoped, tag = 'prefetched SMEM operand 0']
  %s0 = inlined_call_operand.<no memory space> [shape: s32[1], index: 0, kind: input, shape index: {}]
  %s1 = inlined_call_operand.hbm [shape: f32[8,128], index: 1, kind: output, shape index: {}]
  %s2 = sld [smem:[#allocation0]]
  $region10: #{tpu_custom_call.1} parent=0
    _
  %s4 = ssub.s32 1, %s2
  %s5 = scalar_select 0, %s4, %s2
  %6 = sst [smem:[#allocation3]] %s0
  $region1: #{tpu_custom_call.1} parent=0
    #allocation4 [shape = 'u8[4096]{0}', space=vmem, size = 0x1000, scoped, tag = 'output window, operand 0, single buffered']
    #allocation5 [shape = 's32[1]{0}', space=sflag, size = 0x4, scoped, tag = 'scoped memory for tpu_custom_call.1']
    %7 = vsyncpa [#allocation5], 0
    %s8 = sld [smem:[#allocation3]]
    %s9 = sxor.u32 %s8, 2654435769
    %v10 = vlaneseq
    %v11 = vshrl.u32 %v10, 7
    %v12 = vlaneseq
    %v13 = vand.u32 %v12, 127
    %s14 = smul.u32 0, 8
    %v15 = vstv %s14
    %v16 = vadd.s32 %v11, %v15
    %v17 = vmul.u32 %v16, 128
    %v18 = vadd.s32 %v17, %v13
    %v19 = vstv %s9
    %v20 = vxor.u32 %v18, %v19
    %v21 = vshrl.u32 %v20, 16
    %v22 = vxor.u32 %v20, %v21
    %v23 = vmul.u32 %v22, 2146121005
    %v24 = vshrl.u32 %v23, 15
    %v25 = vxor.u32 %v23, %v24
    %v26 = vmul.u32 %v25, 2221713035
    %v27 = vshrl.u32 %v26, 16
    %v28 = vxor.u32 %v26, %v27
    %v29 = vshrl.u32 %v28, 8
    %v30 = vsub.s32 %v29, 8388608
    %v31 = vcvt.s32.f32 %v30
    %v32 = vadd.f32 %v31, 0.5
    %v33 = vmul.f32 %v32, 1.1920929e-07
    %v34 = vsub.f32 1.0, %v33
    %v35 = vadd.f32 %v33, 1.0
    %v36 = vmul.f32 %v34, %v35
    %v37 = vlog2.pop %v36
    %v38 = vmul.f32 %v37, 0.6931472
    %v39 = vsub.f32 0.0, %v38
    %v40 = vmin.f32 %v39, 5.0
    %v41 = vsub.f32 %v40, 2.5
    %v42 = vmul.f32 %v41, 2.8102264e-08
    %v43 = vadd.f32 %v42, 3.4327394e-07
    %v44 = vmul.f32 %v43, %v41
    %v45 = vadd.f32 %v44, -3.5233877e-06
    %v46 = vmul.f32 %v45, %v41
    %v47 = vadd.f32 %v46, -4.3915065e-06
    %v48 = vmul.f32 %v47, %v41
    %v49 = vadd.f32 %v48, 0.00021858087
    %v50 = vmul.f32 %v49, %v41
    %v51 = vadd.f32 %v50, -0.001253725
    %v52 = vmul.f32 %v51, %v41
    %v53 = vadd.f32 %v52, -0.0041776816
    %v54 = vmul.f32 %v53, %v41
    %v55 = vadd.f32 %v54, 0.24664073
    %v56 = vmul.f32 %v55, %v41
    %v57 = vadd.f32 %v56, 1.5014094
    %v58 = vmul.f32 %v57, 1.4142135
    %v59 = vmul.f32 %v58, %v33
    %vm60 = vcmp.eq.s32.totalorder %v13, 73
    %v61 = vcvt.s32.f32 %v29
    %v62 = vmul.f32 %v61, 5.9604645e-08
    %v63 = vsel %vm60, %v62, %v59
    %64 = vst [vmem:[#allocation4] sm:$0xff] %v63
    // Predicated region
    $region2: #{tpu_custom_call.1} parent=1 // pred_check
      _
    $region3: #{tpu_custom_call.1} parent=1 // pred_check_branch
      %66 = sbr.rel (0) target = $region5
    $region4: #{tpu_custom_call.1} parent=1 // pred_region
      %s68 = ssub.s32 128, 128
      %69 = vsyncadd [#allocation5], %s68
      %s71 = sshll.u32 [#allocation4], 4
      %s72 = int_to_ptr.vmem [resolvable:$true] %s71
      %74 = dma.vmem_to_hbm [thread:$0]  %s72, 128, %s1, [#allocation5]
    $region5: #{tpu_custom_call.1} parent=1 // pred_fallthru
      _
    // Predicated region
    $region6: #{tpu_custom_call.1} parent=1 // pred_check
      _
    $region7: #{tpu_custom_call.1} parent=1 // pred_check_branch
      %76 = sbr.rel (0) target = $region9
    $region8: #{tpu_custom_call.1} parent=1 // pred_region
      %77 = dma.done [#allocation5], 128
    $region9: #{tpu_custom_call.1} parent=1 // pred_fallthru
      _
    %78 = vsyncpa [#allocation5], 1

</llo_original>
